<compile_context>
chip_gen: v7x
topology: tpu7x:2x2x1
jax: 0.10.0
libtpu: 0.0.40
codegen_flags: <defaults>
</compile_context>

<pallas_src>
import math

import jax
import jax.numpy as jnp
from jax.experimental import pallas as pl
from jax.experimental.pallas import tpu as pltpu


_RESIDENT_WEIGHT_BUDGET_BYTES = 24 * 1024 * 1024  # counts 2x (double buffering)
_VMEM_LIMIT_BYTES = 48 * 1024 * 1024              # safe on v5e/v6e (128 MiB) and v7x (64 MiB)


def _round_up(x, m):
    return ((x + m - 1) // m) * m


def _pick_tm(M, tm_max=512):
    """M tile: multiple of 8, <= tm_max, and >= 2 grid blocks when M allows
    (so both v7x TensorCores get work); large problems amortize grid overhead
    with up to 512-row tiles."""
    if M <= 8:
        return 8
    tm = min(tm_max, _round_up(M, 8))
    if pl.cdiv(M, tm) < 2 and M > 16:
        tm = max(8, _round_up(pl.cdiv(M, 2), 8))
    return tm


def _filter_linear_kernel(x_ref, wt_ref, b_ref, o_ref):
    # Whole K in one block -> single MXU contraction with f32 accumulation,
    # f32 bias epilogue, direct store (no scratch accumulator).
    acc = jnp.dot(x_ref[...], wt_ref[...], preferred_element_type=jnp.float32)
    o_ref[...] = (acc + b_ref[...]).astype(o_ref.dtype)


def prepare_filter_linear_params(weight, filter_square_matrix, bias=None,
                                 *, compute_dtype=None):
    """Hoist the static mask multiply, transpose, dtype cast and bias reshape
    out of the per-call path (reused across timesteps / a GRU-D scan).

    Returns (wt, bias2d):
      wt:     (in_features, out_features), pre-masked + transposed
      bias2d: (1, out_features), float32 (epilogue math stays f32)
    """
    wt = (filter_square_matrix.astype(weight.dtype) * weight).T   # (K, N)
    if compute_dtype is not None:
        wt = wt.astype(compute_dtype)
    out_features = weight.shape[0]
    if bias is None:
        bias2d = jnp.zeros((1, out_features), jnp.float32)
    else:
        bias2d = bias.astype(jnp.float32).reshape(1, out_features)
    return wt, bias2d


def filter_linear_apply(x, wt, bias2d, *, tm_max=512, tn=512,
                        compute_dtype=None,
                        resident_weight_budget_bytes=_RESIDENT_WEIGHT_BUDGET_BYTES):
    """output = x @ wt + bias, with wt = (filter_square_matrix * weight).T.

    x:      (..., in_features)  -- all leading dims fused into M (one launch
                                   covers e.g. a whole (T, B) sequence).
    wt:     (in_features, out_features)  from prepare_filter_linear_params
    bias2d: (1, out_features) float32
    returns (..., out_features) in x's dtype.
    """
    orig_dtype = x.dtype
    *lead, K = x.shape
    Kw, N = wt.shape
    assert Kw == K, f"in_features mismatch: x has {K}, weight has {Kw}"
    M = math.prod(lead) if lead else 1

    x2 = x.reshape(M, K)                       # no padded HBM copy
    if compute_dtype is not None:
        x2 = x2.astype(compute_dtype)

    tm = _pick_tm(M, tm_max)
    nm = pl.cdiv(M, tm)

    # Resident path budget counts 2x the weight (Pallas double-buffers inputs
    # by default), keeping well inside v7x's 64 MiB VMEM.  bf16 compute_dtype
    # halves this footprint for very large layers.
    resident = 2 * K * N * wt.dtype.itemsize <= resident_weight_budget_bytes

    if resident:
        grid = (nm,)
        in_specs = [
            pl.BlockSpec((tm, K), lambda i: (i, 0)),      # x stream (full K)
            pl.BlockSpec((K, N), lambda i: (0, 0)),       # W^T resident in VMEM
            pl.BlockSpec((1, N), lambda i: (0, 0)),       # bias resident in VMEM
        ]
        out_specs = pl.BlockSpec((tm, N), lambda i: (i, 0))
        dims = ("parallel",)
    else:
        # Large-weight fallback: tile N (256-aligned blocks fill the v6e/v7x
        # 256x256 MXU), keep K whole.
        tn_eff = N if N <= tn else max(128, (tn // 128) * 128)
        nn = pl.cdiv(N, tn_eff)
        grid = (nm, nn)
        in_specs = [
            pl.BlockSpec((tm, K), lambda i, j: (i, 0)),
            pl.BlockSpec((K, tn_eff), lambda i, j: (0, j)),
            pl.BlockSpec((1, tn_eff), lambda i, j: (0, j)),
        ]
        out_specs = pl.BlockSpec((tm, tn_eff), lambda i, j: (i, j))
        dims = ("parallel", "parallel")

    out = pl.pallas_call(
        _filter_linear_kernel,
        out_shape=jax.ShapeDtypeStruct((M, N), orig_dtype),
        grid_spec=pltpu.PrefetchScalarGridSpec(
            num_scalar_prefetch=0,
            grid=grid,
            in_specs=in_specs,
            out_specs=out_specs,
        ),
        compiler_params=pltpu.CompilerParams(
            dimension_semantics=dims,
            vmem_limit_bytes=_VMEM_LIMIT_BYTES,
        ),
    )(x2, wt, bias2d)

    return out.reshape(*lead, N)


def filter_linear(x, weight, filter_square_matrix, bias=None, *,
                  compute_dtype=None, **kwargs):
    """One-shot convenience wrapper (prepares params then applies)."""
    wt, bias2d = prepare_filter_linear_params(
        weight, filter_square_matrix, bias, compute_dtype=compute_dtype)
    return filter_linear_apply(x, wt, bias2d, compute_dtype=compute_dtype,
                               **kwargs)


if __name__ == "__main__":
    # GRU-D uses FilterLinear with a square 0/1 (identity-like) mask.
    in_features = 32
    out_features = 32
    T, B = 16, 8                       # fused M = T*B = 128 in one launch

    key = jax.random.PRNGKey(0)
    kx, kw, kb = jax.random.split(key, 3)
    stdv = 1.0 / math.sqrt(in_features)
    x_seq = jax.random.normal(kx, (T, B, in_features), dtype=jnp.float32)
    weight = jax.random.uniform(kw, (out_features, in_features),
                                minval=-stdv, maxval=stdv, dtype=jnp.float32)
    bias = jax.random.uniform(kb, (out_features,),
                              minval=-stdv, maxval=stdv, dtype=jnp.float32)
    filter_square_matrix = jnp.eye(out_features, in_features, dtype=jnp.float32)

    # Hoisted once, reused for every call (the recurrent GRU-D path).
    wt, bias2d = prepare_filter_linear_params(weight, filter_square_matrix, bias)

    # Whole (T, B) sequence in one launch (resident-weight path, M-only grid).
    out_seq = jax.block_until_ready(filter_linear_apply(x_seq, wt, bias2d))
    # Single GRU-D step (B, in).
    out_step = jax.block_until_ready(filter_linear_apply(x_seq[0], wt, bias2d))
    # Odd M (not a multiple of 8) -> exercises partial boundary blocks.
    x_odd = x_seq.reshape(-1, in_features)[:37]
    out_odd = jax.block_until_ready(filter_linear_apply(x_odd, wt, bias2d))

    hi = jax.lax.Precision.HIGHEST
    fw = filter_square_matrix * weight
    ref_seq = jnp.einsum("tbi,oi->tbo", x_seq, fw, precision=hi) + bias
    ref_step = jnp.dot(x_seq[0], fw.T, precision=hi) + bias
    ref_odd = jnp.dot(x_odd, fw.T, precision=hi) + bias

    assert out_seq.shape == (T, B, out_features)
    assert out_step.shape == (B, out_features)
    assert out_odd.shape == (37, out_features)
    assert jnp.allclose(out_seq, ref_seq, atol=1e-5, rtol=1e-5)
    assert jnp.allclose(out_step, ref_step, atol=1e-5, rtol=1e-5)
    assert jnp.allclose(out_odd, ref_odd, atol=1e-5, rtol=1e-5)

    # Convenience one-shot wrapper.
    out_conv = jax.block_until_ready(
        filter_linear(x_seq, weight, filter_square_matrix, bias))
    assert jnp.allclose(out_conv, ref_seq, atol=1e-5, rtol=1e-5)

    # Exercise the large-weight N-tiled fallback path (forced via budget=0),
    # with non-aligned M/K/N to cover partial boundary blocks there too.
    inb, outb, Mb = 160, 96, 37
    kbx, kbw, kbb, kbm = jax.random.split(jax.random.PRNGKey(1), 4)
    xb = jax.random.normal(kbx, (Mb, inb), dtype=jnp.float32)
    wb = jax.random.normal(kbw, (outb, inb), dtype=jnp.float32) * 0.05
    bb = jax.random.normal(kbb, (outb,), dtype=jnp.float32) * 0.05
    maskb = (jax.random.uniform(kbm, (outb, inb)) > 0.5).astype(jnp.float32)
    wtb, biasb = prepare_filter_linear_params(wb, maskb, bb)
    out_big = jax.block_until_ready(
        filter_linear_apply(xb, wtb, biasb, resident_weight_budget_bytes=0))
    ref_big = jnp.dot(xb, (maskb * wb).T, precision=hi) + bb
    assert out_big.shape == (Mb, outb)
    assert jnp.allclose(out_big, ref_big, atol=1e-4, rtol=1e-4)

    print("KERNEL_OK")
</pallas_src>

<mosaic_0001>
module attributes {stable_mosaic.version = 11 : i64} {
  func.func @_filter_linear_kernel(%arg0: i32, %arg1: memref<64x32xf32, #tpu.memory_space<vmem>>, %arg2: memref<32x32xf32, #tpu.memory_space<vmem>>, %arg3: memref<1x32xf32, #tpu.memory_space<vmem>>, %arg4: memref<64x32xf32, #tpu.memory_space<vmem>>) attributes {dimension_semantics = [#tpu.dimension_semantics<parallel>], iteration_bounds = array<i64: 2>, scalar_prefetch = 0 : i64, scratch_operands = 0 : i64, tpu.core_type = #tpu.core_type<tc>, window_params = [{transform_indices = @transform_0, window_bounds = array<i64: 64, 32>}, {pipeline_mode = #tpu.pipeline_mode<synchronous>, transform_indices = @transform_1, window_bounds = array<i64: 32, 32>}, {pipeline_mode = #tpu.pipeline_mode<synchronous>, transform_indices = @transform_2, window_bounds = array<i64: 1, 32>}, {transform_indices = @transform_3, window_bounds = array<i64: 64, 32>}]} {
    %c0 = arith.constant 0 : index
    %c0_0 = arith.constant 0 : index
    %0 = vector.load %arg1[%c0, %c0_0] : memref<64x32xf32, #tpu.memory_space<vmem>>, vector<64x32xf32>
    %c0_1 = arith.constant 0 : index
    %c0_2 = arith.constant 0 : index
    %1 = vector.load %arg2[%c0_1, %c0_2] : memref<32x32xf32, #tpu.memory_space<vmem>>, vector<32x32xf32>
    %cst = arith.constant dense<0.000000e+00> : vector<64x32xf32>
    %2 = tpu.matmul %0, %1, %cst {dimension_numbers = #tpu.dot_dimension_numbers<[1], [0], [0], [1], [0, 0, 1, 1], [], []>} : vector<64x32xf32>, vector<32x32xf32>, vector<64x32xf32> -> vector<64x32xf32>
    %c0_3 = arith.constant 0 : index
    %c0_4 = arith.constant 0 : index
    %3 = vector.load %arg3[%c0_3, %c0_4] : memref<1x32xf32, #tpu.memory_space<vmem>>, vector<1x32xf32>
    %4 = vector.broadcast %3 : vector<1x32xf32> to vector<64x32xf32>
    %5 = arith.addf %2, %4 : vector<64x32xf32>
    %c0_5 = arith.constant 0 : index
    %c0_6 = arith.constant 0 : index
    %6 = vector.load %arg4[%c0_5, %c0_6] : memref<64x32xf32, #tpu.memory_space<vmem>>, vector<64x32xf32>
    tpu.vector_store %arg4[%c0_5, %c0_6], %5 {strides = array<i32>} : memref<64x32xf32, #tpu.memory_space<vmem>>, vector<64x32xf32>,
    return
  }
  func.func @transform_0(%arg0: i32) -> (i32, i32) {
    %c0_i32 = arith.constant 0 : i32
    %c0_i32_0 = arith.constant 0 : i32
    return %arg0, %c0_i32 : i32, i32
  }
  func.func @transform_1(%arg0: i32) -> (i32, i32) {
    %c0_i32 = arith.constant 0 : i32
    %c0_i32_0 = arith.constant 0 : i32
    %c0_i32_1 = arith.constant 0 : i32
    return %c0_i32, %c0_i32_0 : i32, i32
  }
  func.func @transform_2(%arg0: i32) -> (i32, i32) {
    %c0_i32 = arith.constant 0 : i32
    %c0_i32_0 = arith.constant 0 : i32
    %c0_i32_1 = arith.constant 0 : i32
    return %c0_i32, %c0_i32_0 : i32, i32
  }
  func.func @transform_3(%arg0: i32) -> (i32, i32) {
    %c0_i32 = arith.constant 0 : i32
    %c0_i32_0 = arith.constant 0 : i32
    return %arg0, %c0_i32 : i32, i32
  }
}

</mosaic_0001>

<llo_original>
// kernel: tpu_custom_call.1
$region0: #{tpu_custom_call.1}
  #allocation0 [shape = 'u32[]', space=smem, size = 0x4, offset = 0x4, fixed_abs, tag = 'smem constant byte address 0x4 - core index']
  #allocation1 [shape = 'u32[144,128]{1,0:T(1,128)}', space=vmem, size = 0x12000, scoped, tag = 'internal scratch']
  %s0 = inlined_call_operand.vmem [shape: f32[128,32], index: 0, kind: input, shape index: {}]
  %s1 = inlined_call_operand.vmem [shape: f32[32,32], index: 1, kind: input, shape index: {}]
  %s2 = inlined_call_operand.vmem [shape: f32[1,32], index: 2, kind: input, shape index: {}]
  %s3 = inlined_call_operand.vmem [shape: f32[128,32], index: 3, kind: output, shape index: {}]
  %s4 = sld [smem:[#allocation0]]
  $region45: #{tpu_custom_call.1} parent=0
    _
  %s6 = ssub.s32 1, %s4
  %s7 = scalar_select 0, %s6, %s4
  loop: start=0, step=1, limit=4
  $region2: #{tpu_custom_call.1} parent=0 // loop_pre_header
    _
  $region3: #{tpu_custom_call.1} parent=0 // loop_header
    %s9 = sphi 0, %s13
    %p10 = scmp.ge.s32.totalorder %s9, 4
    %s19 = sphi 0, %s21
    %s22 = sphi 0, %s19
    %s23 = sphi 0, %s22
    %s39 = sphi 0, %s23
    %s43 = sphi 0, %s43
    %s45 = sphi 0, %s43
    %s46 = sphi 0, %s45
    %s60 = sphi 0, %s46
    %s64 = sphi 0, %s64
    %s66 = sphi 0, %s64
    %s67 = sphi 0, %s66
    %s81 = sphi 0, %s67
    %s87 = sphi 0, %s89
    %s90 = sphi 0, %s87
    %s91 = sphi 0, %s90
    %s107 = sphi 0, %s91
  $region4: #{tpu_custom_call.1} parent=0 // loop_header_branch
    %12 = sbr.rel (%p10) target = $region8
  $region5: #{tpu_custom_call.1} parent=0 // loop_body
    %s14 = ssub.s32 %s9, 1
    %s15 = ssub.s32 %s9, 2
    %s16 = sadd.s32 %s9, 1
    %s17 = ssub.s32 %s9, %s16
    %p18 = scmp.eq.s32.totalorder %s17, 0
    %s20 = sadd.s32 %s19, 1
    %s21 = scalar_select %p18, %s19, %s20
    %p24 = pneg %p18
    %p25 = scmp.eq.s32.totalorder %s9, 1
    %p26 = por %p24, %p25
    %p27 = scmp.ne.s32.totalorder %s19, %s22
    %p28 = scmp.eq.s32.totalorder %s9, 0
    %p29 = por %p27, %p28
    %p30 = scmp.ne.s32.totalorder %s19, %s22
    %p31 = scmp.eq.s32.totalorder %s14, 1
    %p32 = por %p30, %p31
    %p33 = scmp.ne.s32.totalorder %s22, %s23
    %p34 = scmp.eq.s32.totalorder %s14, 0
    %p35 = por %p33, %p34
    %p36 = scmp.ne.s32.totalorder %s22, %s23
    %p37 = scmp.eq.s32.totalorder %s15, 1
    %p38 = por %p36, %p37
    %p40 = scmp.ne.s32.totalorder %s23, %s39
    %p41 = scmp.eq.s32.totalorder %s15, 0
    %p42 = por %p40, %p41
    %s44 = sadd.s32 %s43, 1
    %p47 = scmp.eq.s32.totalorder %s9, 1
    %p48 = scmp.ne.s32.totalorder %s43, %s45
    %p49 = scmp.eq.s32.totalorder %s9, 0
    %p50 = por %p48, %p49
    %p51 = scmp.ne.s32.totalorder %s43, %s45
    %p52 = scmp.eq.s32.totalorder %s14, 1
    %p53 = por %p51, %p52
    %p54 = scmp.ne.s32.totalorder %s45, %s46
    %p55 = scmp.eq.s32.totalorder %s14, 0
    %p56 = por %p54, %p55
    %p57 = scmp.ne.s32.totalorder %s45, %s46
    %p58 = scmp.eq.s32.totalorder %s15, 1
    %p59 = por %p57, %p58
    %p61 = scmp.ne.s32.totalorder %s46, %s60
    %p62 = scmp.eq.s32.totalorder %s15, 0
    %p63 = por %p61, %p62
    %s65 = sadd.s32 %s64, 1
    %p68 = scmp.eq.s32.totalorder %s9, 1
    %p69 = scmp.ne.s32.totalorder %s64, %s66
    %p70 = scmp.eq.s32.totalorder %s9, 0
    %p71 = por %p69, %p70
    %p72 = scmp.ne.s32.totalorder %s64, %s66
    %p73 = scmp.eq.s32.totalorder %s14, 1
    %p74 = por %p72, %p73
    %p75 = scmp.ne.s32.totalorder %s66, %s67
    %p76 = scmp.eq.s32.totalorder %s14, 0
    %p77 = por %p75, %p76
    %p78 = scmp.ne.s32.totalorder %s66, %s67
    %p79 = scmp.eq.s32.totalorder %s15, 1
    %p80 = por %p78, %p79
    %p82 = scmp.ne.s32.totalorder %s67, %s81
    %p83 = scmp.eq.s32.totalorder %s15, 0
    %p84 = por %p82, %p83
    %s85 = ssub.s32 %s9, %s16
    %p86 = scmp.eq.s32.totalorder %s85, 0
    %s88 = sadd.s32 %s87, 1
    %s89 = scalar_select %p86, %s87, %s88
    %p92 = pneg %p86
    %p93 = scmp.eq.s32.totalorder %s9, 1
    %p94 = por %p92, %p93
    %p95 = scmp.ne.s32.totalorder %s87, %s90
    %p96 = scmp.eq.s32.totalorder %s9, 0
    %p97 = por %p95, %p96
    %p98 = scmp.ne.s32.totalorder %s87, %s90
    %p99 = scmp.eq.s32.totalorder %s14, 1
    %p100 = por %p98, %p99
    %p101 = scmp.ne.s32.totalorder %s90, %s91
    %p102 = scmp.eq.s32.totalorder %s14, 0
    %p103 = por %p101, %p102
    %p104 = scmp.ne.s32.totalorder %s90, %s91
    %p105 = scmp.eq.s32.totalorder %s15, 1
    %p106 = por %p104, %p105
    %p108 = scmp.ne.s32.totalorder %s91, %s107
    %p109 = scmp.eq.s32.totalorder %s15, 0
    %p110 = por %p108, %p109
    %p111 = scmp.le.s32.totalorder 1, %s9
    %p112 = scmp.lt.s32.totalorder %s9, 3
    %p113 = pnand %p111, %p112
    %p114 = pneg %p113
    // Predicated region
    $region9: #{tpu_custom_call.1} parent=5 // pred_check
      _
    $region10: #{tpu_custom_call.1} parent=5 // pred_check_branch
      %116 = sbr.rel (%p113) target = $region12
    $region11: #{tpu_custom_call.1} parent=5 // pred_region
      %s117 = ssub.s32 %s9, 1
      // Predicated region
      $region13: #{tpu_custom_call.1} parent=11 // pred_check
        %p118 = pneg %p56
      $region14: #{tpu_custom_call.1} parent=11 // pred_check_branch
        %120 = sbr.rel (%p118) target = $region16
      $region15: #{tpu_custom_call.1} parent=11 // pred_region
        _
      $region16: #{tpu_custom_call.1} parent=11 // pred_fallthru
        _
      // Predicated region
      $region17: #{tpu_custom_call.1} parent=11 // pred_check
        %p121 = pneg %p77
      $region18: #{tpu_custom_call.1} parent=11 // pred_check_branch
        %123 = sbr.rel (%p121) target = $region20
      $region19: #{tpu_custom_call.1} parent=11 // pred_region
        _
      $region20: #{tpu_custom_call.1} parent=11 // pred_fallthru
        _
    $region12: #{tpu_custom_call.1} parent=5 // pred_fallthru
      _
    %p124 = scmp.lt.s32.totalorder %s9, 2
    // Predicated region
    $region21: #{tpu_custom_call.1} parent=5 // pred_check
      %p125 = pneg %p124
    $region22: #{tpu_custom_call.1} parent=5 // pred_check_branch
      %127 = sbr.rel (%p125) target = $region24
    $region23: #{tpu_custom_call.1} parent=5 // pred_region
      // Predicated region
      $region25: #{tpu_custom_call.1} parent=23 // pred_check
        %p128 = pneg %p29
      $region26: #{tpu_custom_call.1} parent=23 // pred_check_branch
        %130 = sbr.rel (%p128) target = $region28
      $region27: #{tpu_custom_call.1} parent=23 // pred_region
        %s131 = smul.u32 8, %s9
        %p132 = scmp.lt.s32.totalorder %s131, 15
        %s133 = scalar_select %p132, %s131, 15
        %s134 = smul.addr %s133, 8
        %s135 = scalar_lea.vmem %s0, %s134
        %s136 = smul.u32 8, %s9
      $region28: #{tpu_custom_call.1} parent=23 // pred_fallthru
        _
    $region24: #{tpu_custom_call.1} parent=5 // pred_fallthru
      _
    %p137 = scmp.le.s32.totalorder 1, %s9
    %p138 = scmp.lt.s32.totalorder %s9, 3
    %p139 = pnand %p137, %p138
    %p140 = pneg %p139
    // Predicated region
    $region29: #{tpu_custom_call.1} parent=5 // pred_check
      _
    $region30: #{tpu_custom_call.1} parent=5 // pred_check_branch
      %142 = sbr.rel (%p139) target = $region32
    $region31: #{tpu_custom_call.1} parent=5 // pred_region
      %s143 = ssub.s32 %s9, 1
      %s144 = smul.u32 8, %s14
      %p145 = scmp.lt.s32.totalorder %s144, 15
      %s146 = scalar_select %p145, %s144, 15
      %s147 = smul.addr %s146, 8
      %s148 = scalar_lea.vmem %s0, %s147
      %p149 = pneg %p35
      %p150 = pneg %p32
      %p151 = pneg %p56
      %p152 = pneg %p53
      %p153 = pneg %p77
      %p154 = pneg %p74
      %p155 = pneg %p103
      %p156 = pneg %p100
      %s157 = smul.u32 8, %s14
      %p158 = scmp.lt.s32.totalorder %s157, 15
      %s159 = scalar_select %p158, %s157, 15
      %s160 = smul.addr %s159, 8
      %s161 = scalar_lea.vmem %s3, %s160
      %s162 = smul.u32 8, %s14
      %p163 = scmp.lt.s32.totalorder %s162, 15
      %s164 = scalar_select %p163, %s162, 15
      %s165 = smul.addr %s164, 8
      %s166 = scalar_lea.vmem %s0, %s165
      %s167 = smul.u32 8, %s14
      %s168 = smul.u32 8, %s14
      %p169 = scmp.lt.s32.totalorder %s168, 15
      %s170 = scalar_select %p169, %s168, 15
      %s171 = smul.addr %s170, 8
      %s172 = scalar_lea.vmem %s3, %s171
      %s173 = smul.u32 8, %s14
      %v174 = vld [vmem:[%s166] sm:$0xff]
      %v175 = vld [vmem:[%s166 + $0x8] sm:$0xff]
      %v176 = vld [vmem:[%s166 + $0x10] sm:$0xff]
      %v177 = vld [vmem:[%s166 + $0x18] sm:$0xff]
      %v178 = vld [vmem:[%s166 + $0x20] sm:$0xff]
      %v179 = vld [vmem:[%s166 + $0x28] sm:$0xff]
      %v180 = vld [vmem:[%s166 + $0x30] sm:$0xff]
      %v181 = vld [vmem:[%s166 + $0x38] sm:$0xff]
      %v182 = vld [vmem:[%s1] sm:$0xff]
      %v183 = vld [vmem:[%s1 + $0x8] sm:$0xff]
      %v184 = vld [vmem:[%s1 + $0x10] sm:$0xff]
      %v185 = vld [vmem:[%s1 + $0x18] sm:$0xff]
      %v186 = vld [vmem:[%s2] sm:$0x1]
      %v188 = vlaneseq
      %v189 = vshrl.u32 %v188, 7
      %v190 = vsub.s32 0, %v189
      %v191 = vrot.slane %v186, %v190
      %vm193 = vcmask 261120
      %v195 = vsel %vm193, %v174, 0
      %v198 = vsel %vm193, %v175, 0
      %v201 = vsel %vm193, %v176, 0
      %v204 = vsel %vm193, %v177, 0
      %v207 = vsel %vm193, %v178, 0
      %v210 = vsel %vm193, %v179, 0
      %v213 = vsel %vm193, %v180, 0
      %v216 = vsel %vm193, %v181, 0
      %218 = vmatprep.subr.mxu0 0.0
      %219 = vmatpush1.msra.mxu0 %v182
      %220 = vmatprep.subr.mxu0 0.0
      %221 = vmatpush1.msra.mxu0 %v183
      %222 = vmatprep.subr.mxu0 0.0
      %223 = vmatpush1.msra.mxu0 %v184
      %224 = vmatprep.subr.mxu0 0.0
      %225 = vmatpush1.msra.mxu0 %v185
      %226 = vmatprep.subr.mxu0 0.0
      %227 = vmatpush1.msra.mxu0 0.0
      %228 = vmatprep.subr.mxu0 0.0
      %229 = vmatpush1.msra.mxu0 0.0
      %230 = vmatprep.subr.mxu0 0.0
      %231 = vmatpush1.msra.mxu0 0.0
      %232 = vmatprep.subr.mxu0 0.0
      %233 = vmatpush1.msra.mxu0 0.0
      %234 = vmatprep.subr.mxu0 0.0
      %235 = vmatpush1.msra.mxu0 0.0
      %236 = vmatprep.subr.mxu0 0.0
      %237 = vmatpush1.msra.mxu0 0.0
      %238 = vmatprep.subr.mxu0 0.0
      %239 = vmatpush1.msra.mxu0 0.0
      %240 = vmatprep.subr.mxu0 0.0
      %241 = vmatpush1.msra.mxu0 0.0
      %242 = vmatprep.subr.mxu0 0.0
      %243 = vmatpush1.msra.mxu0 0.0
      %244 = vmatprep.subr.mxu0 0.0
      %245 = vmatpush1.msra.mxu0 0.0
      %246 = vmatprep.subr.mxu0 0.0
      %247 = vmatpush1.msra.mxu0 0.0
      %248 = vmatprep.subr.mxu0 0.0
      %249 = vmatpush1.msra.mxu0 0.0
      %250 = vmatprep.subr.mxu0 0.0
      %251 = vmatpush1.msra.mxu0 0.0
      %252 = vmatprep.subr.mxu0 0.0
      %253 = vmatpush1.msra.mxu0 0.0
      %254 = vmatprep.subr.mxu0 0.0
      %255 = vmatpush1.msra.mxu0 0.0
      %256 = vmatprep.subr.mxu0 0.0
      %257 = vmatpush1.msra.mxu0 0.0
      %258 = vmatprep.subr.mxu0 0.0
      %259 = vmatpush1.msra.mxu0 0.0
      %260 = vmatprep.subr.mxu0 0.0
      %261 = vmatpush1.msra.mxu0 0.0
      %262 = vmatprep.subr.mxu0 0.0
      %263 = vmatpush1.msra.mxu0 0.0
      %264 = vmatprep.subr.mxu0 0.0
      %265 = vmatpush1.msra.mxu0 0.0
      %266 = vmatprep.subr.mxu0 0.0
      %267 = vmatpush1.msra.mxu0 0.0
      %268 = vmatprep.subr.mxu0 0.0
      %269 = vmatpush1.msra.mxu0 0.0
      %270 = vmatprep.subr.mxu0 0.0
      %271 = vmatpush1.msra.mxu0 0.0
      %272 = vmatprep.subr.mxu0 0.0
      %273 = vmatpush1.msra.mxu0 0.0
      %274 = vmatprep.subr.mxu0 0.0
      %275 = vmatpush1.msra.mxu0 0.0
      %276 = vmatprep.subr.mxu0 0.0
      %277 = vmatpush1.msra.mxu0 0.0
      %278 = vmatprep.subr.mxu0 0.0
      %279 = vmatpush1.msra.mxu0 0.0
      %280 = vmatprep.subr.mxu0 0.0
      %281 = vmatpush1.msra.mxu0 0.0
      %282 = vmatprep.mubr.f32.mxu0 0.0
      %283 = vmatmul.mubr.f32.gmra.mrb[0].mxu0 %v195
      %v284 = vpop.f32.mrb[0].mxu0
      %v285 = vadd.f32 %v191, %v284
      %v286 = vpop.f32.mrb[0].mxu0
      %287 = vmatprep.mubr.f32.mxu0 0.0
      %288 = vmatmul.mubr.f32.gmra.mrb[0].mxu0 %v198
      %v289 = vpop.f32.mrb[0].mxu0
      %v290 = vadd.f32 %v191, %v289
      %v291 = vpop.f32.mrb[0].mxu0
      %292 = vmatprep.mubr.f32.mxu0 0.0
      %293 = vmatmul.mubr.f32.gmra.mrb[0].mxu0 %v201
      %v294 = vpop.f32.mrb[0].mxu0
      %v295 = vadd.f32 %v191, %v294
      %v296 = vpop.f32.mrb[0].mxu0
      %297 = vmatprep.mubr.f32.mxu0 0.0
      %298 = vmatmul.mubr.f32.gmra.mrb[0].mxu0 %v204
      %v299 = vpop.f32.mrb[0].mxu0
      %v300 = vadd.f32 %v191, %v299
      %v301 = vpop.f32.mrb[0].mxu0
      %302 = vmatprep.mubr.f32.mxu0 0.0
      %303 = vmatmul.mubr.f32.gmra.mrb[0].mxu0 %v207
      %v304 = vpop.f32.mrb[0].mxu0
      %v305 = vadd.f32 %v191, %v304
      %v306 = vpop.f32.mrb[0].mxu0
      %307 = vmatprep.mubr.f32.mxu0 0.0
      %308 = vmatmul.mubr.f32.gmra.mrb[0].mxu0 %v210
      %v309 = vpop.f32.mrb[0].mxu0
      %v310 = vadd.f32 %v191, %v309
      %v311 = vpop.f32.mrb[0].mxu0
      %312 = vmatprep.mubr.f32.mxu0 0.0
      %313 = vmatmul.mubr.f32.gmra.mrb[0].mxu0 %v213
      %v314 = vpop.f32.mrb[0].mxu0
      %v315 = vadd.f32 %v191, %v314
      %v316 = vpop.f32.mrb[0].mxu0
      %317 = vmatprep.mubr.f32.mxu0 0.0
      %318 = vmatmul.mubr.f32.gmra.mrb[0].mxu0 %v216
      %v319 = vpop.f32.mrb[0].mxu0
      %v320 = vadd.f32 %v191, %v319
      %v321 = vpop.f32.mrb[0].mxu0
      %322 = vdwg.mxu0
      %323 = vst.msk [vmem:[%s172] sm:$0xff] %vm193, %v285
      %324 = vst.msk [vmem:[%s172 + $0x8] sm:$0xff] %vm193, %v290
      %325 = vst.msk [vmem:[%s172 + $0x10] sm:$0xff] %vm193, %v295
      %326 = vst.msk [vmem:[%s172 + $0x18] sm:$0xff] %vm193, %v300
      %327 = vst.msk [vmem:[%s172 + $0x20] sm:$0xff] %vm193, %v305
      %328 = vst.msk [vmem:[%s172 + $0x28] sm:$0xff] %vm193, %v310
      %329 = vst.msk [vmem:[%s172 + $0x30] sm:$0xff] %vm193, %v315
      %330 = vst.msk [vmem:[%s172 + $0x38] sm:$0xff] %vm193, %v320
      %s331 = smul.u32 8, %s14
      %p332 = scmp.lt.s32.totalorder %s331, 15
      %s333 = scalar_select %p332, %s331, 15
      %s334 = smul.addr %s333, 8
      %s335 = scalar_lea.vmem %s3, %s334
      // Predicated region
      $region33: #{tpu_custom_call.1} parent=31 // pred_check
        %p336 = pneg %p100
      $region34: #{tpu_custom_call.1} parent=31 // pred_check_branch
        %338 = sbr.rel (%p336) target = $region36
      $region35: #{tpu_custom_call.1} parent=31 // pred_region
        %s339 = smul.u32 8, %s14
      $region36: #{tpu_custom_call.1} parent=31 // pred_fallthru
        _
    $region32: #{tpu_custom_call.1} parent=5 // pred_fallthru
      _
    %p340 = scmp.le.s32.totalorder 2, %s9
    // Predicated region
    $region37: #{tpu_custom_call.1} parent=5 // pred_check
      %p341 = pneg %p340
    $region38: #{tpu_custom_call.1} parent=5 // pred_check_branch
      %343 = sbr.rel (%p341) target = $region40
    $region39: #{tpu_custom_call.1} parent=5 // pred_region
      %s344 = ssub.s32 %s9, 2
      // Predicated region
      $region41: #{tpu_custom_call.1} parent=39 // pred_check
        %p345 = pneg %p106
      $region42: #{tpu_custom_call.1} parent=39 // pred_check_branch
        %347 = sbr.rel (%p345) target = $region44
      $region43: #{tpu_custom_call.1} parent=39 // pred_region
        %s348 = smul.u32 8, %s15
        %p349 = scmp.lt.s32.totalorder %s348, 15
        %s350 = scalar_select %p349, %s348, 15
        %s351 = smul.addr %s350, 8
        %s352 = scalar_lea.vmem %s3, %s351
      $region44: #{tpu_custom_call.1} parent=39 // pred_fallthru
        _
    $region40: #{tpu_custom_call.1} parent=5 // pred_fallthru
      _
  $region6: #{tpu_custom_call.1} parent=0 // loop_footer
    %s13 = sadd.s32 1, %s9
  $region7: #{tpu_custom_call.1} parent=0 // loop_footer_branch
    %8 = sbr.rel target = $region3
  $region8: #{tpu_custom_call.1} parent=0 // loop_exit
    _

</llo_original>
